<compile_context>
chip_gen: v6e
topology: v6e:2x2x1
jax: 0.10.0
libtpu: 0.0.40
codegen_flags: <defaults>
</compile_context>

<pallas_src>
import functools

import jax
import jax.numpy as jnp
from jax import lax
from jax.experimental import pallas as pl
from jax.experimental.pallas import tpu as pltpu


def _round_up(x, m):
    return (x + m - 1) // m * m


def _f32_to_key(x):
    """Order-preserving map float32 -> int32 (signed int compare == float compare)."""
    i = pltpu.bitcast(x, jnp.int32)
    return i ^ ((i >> 31) & 0x7FFFFFFF)


def _key_to_f32(k):
    """Inverse of _f32_to_key (the bit transform is an involution)."""
    return pltpu.bitcast(k ^ ((k >> 31) & 0x7FFFFFFF), jnp.float32)


def _row_reduce(x):
    """Sum a (n_tiles, tb, tn) array over bank tiles and lanes -> (1, tb, 1)."""
    return jnp.sum(jnp.sum(x, axis=2, keepdims=True), axis=0, keepdims=True)


def _ring_loss_kernel(points_ref, idx_ref, bank_ref, sim_ref, logr_ref,
                      row_ref, pos_ref, *, inv_t, n_background,
                      n_potential_positive, n_valid, mask_cols):
    k = pl.program_id(1)                         # bank-tile index (inner, "arbitrary")
    last_k = pl.num_programs(1) - 1
    tb, tn = sim_ref.shape

    # ---------------- streaming phase: one (tb, tn) similarity tile ----------------
    pts = points_ref[...].astype(jnp.float32)
    normed = pts * lax.rsqrt(jnp.sum(pts * pts, axis=1, keepdims=True))
    sim = lax.dot_general(normed.astype(bank_ref.dtype), bank_ref[...],
                          (((1,), (1,)), ((), ())),
                          preferred_element_type=jnp.float32)        # (tb, tn) on MXU
    sim_ref[...] = sim.astype(sim_ref.dtype)

    col = k * tn + lax.broadcasted_iota(jnp.int32, (tb, tn), 1)      # global bank column

    # Keep the full row resident in VMEM scratch for the selection phase.
    # Padded bank columns are forced to -inf so they can never enter the top-k.
    if mask_cols:
        row_ref[k] = jnp.where(col < n_valid, sim, -jnp.inf)
    else:
        row_ref[k] = sim

    # Positive similarity gather (one element per row), accumulated across tiles.
    @pl.when(k == 0)
    def _init():
        pos_ref[...] = jnp.zeros_like(pos_ref)

    pos_ref[...] += jnp.sum(jnp.where(col == idx_ref[...], sim, 0.0),
                            axis=1, keepdims=True)

    # ---------------- selection / loss phase: once per B tile ----------------
    @pl.when(k == last_k)
    def _finalize():
        data = row_ref[...]                      # (n_tiles, tb, tn) f32
        keys = _f32_to_key(data)                 # order-preserving int32 keys
        evals = jnp.exp(data * inv_t)            # single EUP pass; exp(-inf) == 0

        def kth_largest_key(kk):
            # Largest int32 threshold T with count(keys >= T) >= kk  (exact k-th value).
            lo = jnp.full((1, tb, 1), jnp.iinfo(jnp.int32).min, jnp.int32)
            hi = jnp.full((1, tb, 1), jnp.iinfo(jnp.int32).max, jnp.int32)

            def body(_, carry):
                lo, hi = carry
                mid = (lo | hi) - ((lo ^ hi) >> 1)     # ceil((lo+hi)/2), overflow-safe
                cnt = _row_reduce((keys >= mid).astype(jnp.float32))
                take = cnt >= float(kk)
                return jnp.where(take, mid, lo), jnp.where(take, hi, mid - 1)

            lo, _ = lax.fori_loop(0, 32, body, (lo, hi))
            return lo                                   # (1, tb, 1) int32

        def topk_exp_sum(kth, kk):
            gt = keys > kth
            sum_gt = _row_reduce(jnp.where(gt, evals, 0.0))
            cnt_gt = _row_reduce(gt.astype(jnp.float32))
            thr_exp = jnp.exp(_key_to_f32(kth) * inv_t)     # exp of the k-th value
            return sum_gt + (float(kk) - cnt_gt) * thr_exp  # exact tie correction

        hn_sum = topk_exp_sum(kth_largest_key(n_background), n_background)
        pp_sum = topk_exp_sum(kth_largest_key(n_potential_positive),
                              n_potential_positive)

        pos_exp = jnp.exp(pos_ref[...] * inv_t)             # (tb, 1)
        total_pos = pos_exp + jnp.reshape(pp_sum, (tb, 1))
        ratio = total_pos / jnp.reshape(hn_sum, (tb, 1)) + 1e-7
        logr_ref[...] = jnp.log(ratio)


def ring_loss(points, point_indices, memory_bank, *, t,
              n_potential_positive=100, n_background=4096,
              b_tile=128, n_tile=512):
    """Pallas RingLoss forward.  Returns (loss, similarities)."""
    B, D = points.shape
    N, Db = memory_bank.shape
    assert D == Db
    assert n_background <= N and n_potential_positive <= n_background

    tb = min(b_tile, _round_up(B, 8))        # batch tile (sublane-aligned)
    tn = min(n_tile, _round_up(N, 128))      # bank tile (lane-aligned)
    b_pad = _round_up(B, tb)
    n_pad = _round_up(N, tn)
    d_pad = _round_up(D, 128)                # zero-padding D is numerically inert

    pts = jnp.pad(points, ((0, b_pad - B), (0, d_pad - D)))
    if b_pad > B:                            # keep padded rows finite (avoid 1/sqrt(0))
        pts = pts.at[B:, 0].set(1.0)
    bank = jnp.pad(memory_bank, ((0, n_pad - N), (0, d_pad - D)))
    idx = jnp.pad(point_indices.astype(jnp.int32).reshape(B, 1),
                  ((0, b_pad - B), (0, 0)))

    nb, nn = b_pad // tb, n_pad // tn
    sim_dtype = jnp.result_type(points.dtype, memory_bank.dtype)

    kernel = functools.partial(
        _ring_loss_kernel,
        inv_t=1.0 / float(t),
        n_background=int(n_background),
        n_potential_positive=int(n_potential_positive),
        n_valid=int(N),
        mask_cols=n_pad > N)

    sim, logr = pl.pallas_call(
        kernel,
        out_shape=(jax.ShapeDtypeStruct((b_pad, n_pad), sim_dtype),
                   jax.ShapeDtypeStruct((b_pad, 1), jnp.float32)),
        grid_spec=pltpu.PrefetchScalarGridSpec(
            num_scalar_prefetch=0,
            grid=(nb, nn),
            in_specs=[
                pl.BlockSpec((tb, d_pad), lambda i, k: (i, 0)),   # points tile
                pl.BlockSpec((tb, 1), lambda i, k: (i, 0)),       # positive indices
                pl.BlockSpec((tn, d_pad), lambda i, k: (k, 0)),   # bank tile (streamed)
            ],
            out_specs=(
                pl.BlockSpec((tb, tn), lambda i, k: (i, k)),      # similarities tile
                pl.BlockSpec((tb, 1), lambda i, k: (i, 0)),       # per-row log-ratio
            ),
            scratch_shapes=[
                pltpu.VMEM((nn, tb, tn), jnp.float32),   # full sim row per B tile
                pltpu.VMEM((tb, 1), jnp.float32),        # positive-sim accumulator
            ]),
        compiler_params=pltpu.CompilerParams(
            dimension_semantics=("parallel", "arbitrary"),
            # Tile sizes above keep the footprint well under v7x's 64 MiB VMEM;
            # raise the scoped limit explicitly (48 MiB fits every generation).
            vmem_limit_bytes=48 * 1024 * 1024),
    )(pts, idx, bank)

    loss = -jnp.mean(logr[:B, 0])
    return loss, sim[:B, :N]


def ring_loss_ref(points, point_indices, memory_bank, *, t,
                  n_potential_positive, n_background):
    """Plain-JAX reference mirroring the PyTorch module (for verification)."""
    normed = points / jnp.sqrt(jnp.sum(points ** 2, axis=1, keepdims=True))
    sim = normed @ memory_bank.T
    ps = jnp.exp(sim / t)
    pos = ps[jnp.arange(points.shape[0]), point_indices]
    hn, _ = lax.top_k(ps, n_background)
    total_pos = pos + hn[:, :n_potential_positive].sum(axis=1)
    loss = -jnp.mean(jnp.log(total_pos / hn.sum(axis=1) + 1e-7))
    return loss, sim


if __name__ == "__main__":
    # Small synthetic problem consistent with the module's forward.
    B, D, N = 4, 32, 256
    t = 0.1
    n_background = 64
    n_potential_positive = 8

    key = jax.random.PRNGKey(0)
    k_pts, k_bank, k_idx = jax.random.split(key, 3)

    points = jax.random.normal(k_pts, (B, D), dtype=jnp.float32)
    bank = jax.random.normal(k_bank, (N, D), dtype=jnp.float32)
    # memory banks typically store l2-normalized features
    bank = bank / jnp.sqrt(jnp.sum(bank ** 2, axis=1, keepdims=True))
    point_indices = jax.random.randint(k_idx, (B,), 0, N, dtype=jnp.int32)

    loss, sim = ring_loss(points, point_indices, bank, t=t,
                          n_potential_positive=n_potential_positive,
                          n_background=n_background)
    jax.block_until_ready((loss, sim))

    loss_ref, sim_ref = ring_loss_ref(points, point_indices, bank, t=t,
                                      n_potential_positive=n_potential_positive,
                                      n_background=n_background)
    assert jnp.allclose(sim, sim_ref, rtol=1e-4, atol=1e-5), "similarities mismatch"
    assert jnp.allclose(loss, loss_ref, rtol=1e-3, atol=1e-5), "loss mismatch"

    print("KERNEL_OK")
</pallas_src>

<mosaic_0001>
module attributes {stable_mosaic.version = 11 : i64} {
  func.func @_ring_loss_kernel(%arg0: i32, %arg1: i32, %arg2: memref<8x128xf32, #tpu.memory_space<vmem>>, %arg3: memref<8x1xi32, #tpu.memory_space<vmem>>, %arg4: memref<256x128xf32, #tpu.memory_space<vmem>>, %arg5: memref<8x256xf32, #tpu.memory_space<vmem>>, %arg6: memref<8x1xf32, #tpu.memory_space<vmem>>, %arg7: memref<1x8x256xf32, #tpu.memory_space<vmem>>, %arg8: memref<8x1xf32, #tpu.memory_space<vmem>>) attributes {dimension_semantics = [#tpu.dimension_semantics<parallel>, #tpu.dimension_semantics<arbitrary>], iteration_bounds = array<i64: 1, 1>, scalar_prefetch = 0 : i64, scratch_operands = 2 : i64, tpu.core_type = #tpu.core_type<tc>, window_params = [{transform_indices = @transform_0, window_bounds = array<i64: 8, 128>}, {transform_indices = @transform_1, window_bounds = array<i64: 8, 1>}, {transform_indices = @transform_2, window_bounds = array<i64: 256, 128>}, {transform_indices = @transform_3, window_bounds = array<i64: 8, 256>}, {transform_indices = @transform_4, window_bounds = array<i64: 8, 1>}]} {
    %c0 = arith.constant 0 : index
    %c0_0 = arith.constant 0 : index
    %0 = vector.load %arg2[%c0, %c0_0] : memref<8x128xf32, #tpu.memory_space<vmem>>, vector<8x128xf32>
    %1 = arith.mulf %0, %0 : vector<8x128xf32>
    %cst = arith.constant dense<0.000000e+00> : vector<8xf32>
    %2 = vector.multi_reduction <add>, %1, %cst [1] : vector<8x128xf32> to vector<8xf32>
    %3 = vector.shape_cast %2 : vector<8xf32> to vector<8x1xf32>
    %4 = math.rsqrt %3 : vector<8x1xf32>
    %5 = vector.broadcast %4 : vector<8x1xf32> to vector<8x128xf32>
    %6 = arith.mulf %0, %5 : vector<8x128xf32>
    %c0_1 = arith.constant 0 : index
    %c0_2 = arith.constant 0 : index
    %7 = vector.load %arg4[%c0_1, %c0_2] : memref<256x128xf32, #tpu.memory_space<vmem>>, vector<256x128xf32>
    %cst_3 = arith.constant dense<0.000000e+00> : vector<8x256xf32>
    %8 = tpu.matmul %6, %7, %cst_3 {dimension_numbers = #tpu.dot_dimension_numbers<[1], [1], [0], [0], [0, 0, 1, 0], [], []>} : vector<8x128xf32>, vector<256x128xf32>, vector<8x256xf32> -> vector<8x256xf32>
    %c0_4 = arith.constant 0 : index
    %c0_5 = arith.constant 0 : index
    %9 = vector.load %arg5[%c0_4, %c0_5] : memref<8x256xf32, #tpu.memory_space<vmem>>, vector<8x256xf32>
    tpu.vector_store %arg5[%c0_4, %c0_5], %8 {strides = array<i32>} : memref<8x256xf32, #tpu.memory_space<vmem>>, vector<8x256xf32>,
    %c256_i32 = arith.constant 256 : i32
    %10 = arith.muli %arg1, %c256_i32 : i32
    %11 = tpu.iota {dimensions = array<i32: 1>} : vector<8x256xi32>
    %12 = vector.broadcast %10 : i32 to vector<8x256xi32>
    %13 = arith.addi %12, %11 : vector<8x256xi32>
    %14 = arith.index_cast %arg1 : i32 to index
    %c0_6 = arith.constant 0 : index
    %c0_7 = arith.constant 0 : index
    %15 = vector.load %arg7[%14, %c0_6, %c0_7] : memref<1x8x256xf32, #tpu.memory_space<vmem>>, vector<1x8x256xf32>
    %16 = vector.shape_cast %15 : vector<1x8x256xf32> to vector<8x256xf32>
    %17 = vector.shape_cast %8 : vector<8x256xf32> to vector<1x8x256xf32>
    tpu.vector_store %arg7[%14, %c0_6, %c0_7], %17 {strides = array<i32>} : memref<1x8x256xf32, #tpu.memory_space<vmem>>, vector<1x8x256xf32>,
    %c0_i32 = arith.constant 0 : i32
    %18 = arith.cmpi eq, %arg1, %c0_i32 : i32
    %19 = arith.extui %18 : i1 to i32
    %c0_i32_8 = arith.constant 0 : i32
    %20 = arith.cmpi ne, %19, %c0_i32_8 : i32
    scf.if %20 {
      %cst_19 = arith.constant 0.000000e+00 : f32
      %34 = vector.broadcast %cst_19 : f32 to vector<8x1xf32>
      %c0_20 = arith.constant 0 : index
      %c0_21 = arith.constant 0 : index
      %35 = vector.load %arg8[%c0_20, %c0_21] : memref<8x1xf32, #tpu.memory_space<vmem>>, vector<8x1xf32>
      tpu.vector_store %arg8[%c0_20, %c0_21], %34 {strides = array<i32>} : memref<8x1xf32, #tpu.memory_space<vmem>>, vector<8x1xf32>,
    } else {
    }
    %c0_9 = arith.constant 0 : index
    %c0_10 = arith.constant 0 : index
    %21 = vector.load %arg8[%c0_9, %c0_10] : memref<8x1xf32, #tpu.memory_space<vmem>>, vector<8x1xf32>
    %c0_11 = arith.constant 0 : index
    %c0_12 = arith.constant 0 : index
    %22 = vector.load %arg3[%c0_11, %c0_12] : memref<8x1xi32, #tpu.memory_space<vmem>>, vector<8x1xi32>
    %23 = vector.broadcast %22 : vector<8x1xi32> to vector<8x256xi32>
    %24 = arith.cmpi eq, %13, %23 : vector<8x256xi32>
    %cst_13 = arith.constant 0.000000e+00 : f32
    %25 = vector.broadcast %cst_13 : f32 to vector<8x256xf32>
    %26 = arith.select %24, %8, %25 : vector<8x256xi1>, vector<8x256xf32>
    %cst_14 = arith.constant dense<0.000000e+00> : vector<8xf32>
    %27 = vector.multi_reduction <add>, %26, %cst_14 [1] : vector<8x256xf32> to vector<8xf32>
    %28 = vector.shape_cast %27 : vector<8xf32> to vector<8x1xf32>
    %29 = arith.addf %21, %28 : vector<8x1xf32>
    %c0_15 = arith.constant 0 : index
    %c0_16 = arith.constant 0 : index
    %30 = vector.load %arg8[%c0_15, %c0_16] : memref<8x1xf32, #tpu.memory_space<vmem>>, vector<8x1xf32>
    tpu.vector_store %arg8[%c0_15, %c0_16], %29 {strides = array<i32>} : memref<8x1xf32, #tpu.memory_space<vmem>>, vector<8x1xf32>,
    %c0_i32_17 = arith.constant 0 : i32
    %31 = arith.cmpi eq, %arg1, %c0_i32_17 : i32
    %32 = arith.extui %31 : i1 to i32
    %c0_i32_18 = arith.constant 0 : i32
    %33 = arith.cmpi ne, %32, %c0_i32_18 : i32
    scf.if %33 {
      %c0_19 = arith.constant 0 : index
      %c0_20 = arith.constant 0 : index
      %c0_21 = arith.constant 0 : index
      %34 = vector.load %arg7[%c0_19, %c0_20, %c0_21] : memref<1x8x256xf32, #tpu.memory_space<vmem>>, vector<1x8x256xf32>
      %35 = tpu.bitcast %34 : vector<1x8x256xf32> -> vector<1x8x256xi32>
      %c31_i32 = arith.constant 31 : i32
      %36 = vector.broadcast %c31_i32 : i32 to vector<1x8x256xi32>
      %37 = arith.shrsi %35, %36 : vector<1x8x256xi32>
      %c2147483647_i32 = arith.constant 2147483647 : i32
      %38 = vector.broadcast %c2147483647_i32 : i32 to vector<1x8x256xi32>
      %39 = arith.andi %37, %38 : vector<1x8x256xi32>
      %40 = arith.xori %35, %39 : vector<1x8x256xi32>
      %cst_22 = arith.constant 1.000000e+01 : f32
      %41 = vector.broadcast %cst_22 : f32 to vector<1x8x256xf32>
      %42 = arith.mulf %34, %41 : vector<1x8x256xf32>
      %43 = math.exp %42 : vector<1x8x256xf32>
      %c-2147483648_i32 = arith.constant -2147483648 : i32
      %44 = vector.broadcast %c-2147483648_i32 : i32 to vector<1x8x1xi32>
      %c2147483647_i32_23 = arith.constant 2147483647 : i32
      %45 = vector.broadcast %c2147483647_i32_23 : i32 to vector<1x8x1xi32>
      %c0_i32_24 = arith.constant 0 : i32
      %c32_i32 = arith.constant 32 : i32
      %46 = arith.addi %c0_i32_24, %c32_i32 : i32
      %c1_i32 = arith.constant 1 : i32
      %47:2 = scf.for %arg9 = %c0_i32_24 to %46 step %c1_i32 iter_args(%arg10 = %44, %arg11 = %45) -> (vector<1x8x1xi32>, vector<1x8x1xi32>)  : i32 {
        %118 = arith.ori %arg10, %arg11 : vector<1x8x1xi32>
        %119 = arith.xori %arg10, %arg11 : vector<1x8x1xi32>
        %c1_i32_54 = arith.constant 1 : i32
        %120 = vector.broadcast %c1_i32_54 : i32 to vector<1x8x1xi32>
        %121 = arith.shrsi %119, %120 : vector<1x8x1xi32>
        %122 = arith.subi %118, %121 : vector<1x8x1xi32>
        %123 = vector.broadcast %122 : vector<1x8x1xi32> to vector<1x8x256xi32>
        %124 = arith.cmpi sge, %40, %123 : vector<1x8x256xi32>
        %125 = arith.extui %124 : vector<1x8x256xi1> to vector<1x8x256xi32>
        %126 = arith.sitofp %125 : vector<1x8x256xi32> to vector<1x8x256xf32>
        %cst_55 = arith.constant dense<0.000000e+00> : vector<1x8xf32>
        %127 = vector.multi_reduction <add>, %126, %cst_55 [2] : vector<1x8x256xf32> to vector<1x8xf32>
        %128 = vector.shape_cast %127 : vector<1x8xf32> to vector<1x8x1xf32>
        %cst_56 = arith.constant dense<0.000000e+00> : vector<8x1xf32>
        %129 = vector.multi_reduction <add>, %128, %cst_56 [0] : vector<1x8x1xf32> to vector<8x1xf32>
        %130 = vector.shape_cast %129 : vector<8x1xf32> to vector<1x8x1xf32>
        %cst_57 = arith.constant 6.400000e+01 : f32
        %131 = vector.broadcast %cst_57 : f32 to vector<1x8x1xf32>
        %132 = arith.cmpf oge, %130, %131 : vector<1x8x1xf32>
        %133 = arith.select %132, %122, %arg10 : vector<1x8x1xi1>, vector<1x8x1xi32>
        %c1_i32_58 = arith.constant 1 : i32
        %134 = vector.broadcast %c1_i32_58 : i32 to vector<1x8x1xi32>
        %135 = arith.subi %122, %134 : vector<1x8x1xi32>
        %136 = arith.select %132, %arg11, %135 : vector<1x8x1xi1>, vector<1x8x1xi32>
        scf.yield %133, %136 : vector<1x8x1xi32>, vector<1x8x1xi32>
      }
      %48 = vector.broadcast %47#0 : vector<1x8x1xi32> to vector<1x8x256xi32>
      %49 = arith.cmpi sgt, %40, %48 : vector<1x8x256xi32>
      %cst_25 = arith.constant 0.000000e+00 : f32
      %50 = vector.broadcast %cst_25 : f32 to vector<1x8x256xf32>
      %51 = arith.select %49, %43, %50 : vector<1x8x256xi1>, vector<1x8x256xf32>
      %cst_26 = arith.constant dense<0.000000e+00> : vector<1x8xf32>
      %52 = vector.multi_reduction <add>, %51, %cst_26 [2] : vector<1x8x256xf32> to vector<1x8xf32>
      %53 = vector.shape_cast %52 : vector<1x8xf32> to vector<1x8x1xf32>
      %cst_27 = arith.constant dense<0.000000e+00> : vector<8x1xf32>
      %54 = vector.multi_reduction <add>, %53, %cst_27 [0] : vector<1x8x1xf32> to vector<8x1xf32>
      %55 = vector.shape_cast %54 : vector<8x1xf32> to vector<1x8x1xf32>
      %56 = arith.extui %49 : vector<1x8x256xi1> to vector<1x8x256xi32>
      %57 = arith.sitofp %56 : vector<1x8x256xi32> to vector<1x8x256xf32>
      %cst_28 = arith.constant dense<0.000000e+00> : vector<1x8xf32>
      %58 = vector.multi_reduction <add>, %57, %cst_28 [2] : vector<1x8x256xf32> to vector<1x8xf32>
      %59 = vector.shape_cast %58 : vector<1x8xf32> to vector<1x8x1xf32>
      %cst_29 = arith.constant dense<0.000000e+00> : vector<8x1xf32>
      %60 = vector.multi_reduction <add>, %59, %cst_29 [0] : vector<1x8x1xf32> to vector<8x1xf32>
      %61 = vector.shape_cast %60 : vector<8x1xf32> to vector<1x8x1xf32>
      %c31_i32_30 = arith.constant 31 : i32
      %62 = vector.broadcast %c31_i32_30 : i32 to vector<1x8x1xi32>
      %63 = arith.shrsi %47#0, %62 : vector<1x8x1xi32>
      %c2147483647_i32_31 = arith.constant 2147483647 : i32
      %64 = vector.broadcast %c2147483647_i32_31 : i32 to vector<1x8x1xi32>
      %65 = arith.andi %63, %64 : vector<1x8x1xi32>
      %66 = arith.xori %47#0, %65 : vector<1x8x1xi32>
      %67 = tpu.bitcast %66 : vector<1x8x1xi32> -> vector<1x8x1xf32>
      %cst_32 = arith.constant 1.000000e+01 : f32
      %68 = vector.broadcast %cst_32 : f32 to vector<1x8x1xf32>
      %69 = arith.mulf %67, %68 : vector<1x8x1xf32>
      %70 = math.exp %69 : vector<1x8x1xf32>
      %cst_33 = arith.constant 6.400000e+01 : f32
      %71 = vector.broadcast %cst_33 : f32 to vector<1x8x1xf32>
      %72 = arith.subf %71, %61 : vector<1x8x1xf32>
      %73 = arith.mulf %72, %70 : vector<1x8x1xf32>
      %74 = arith.addf %55, %73 : vector<1x8x1xf32>
      %c-2147483648_i32_34 = arith.constant -2147483648 : i32
      %75 = vector.broadcast %c-2147483648_i32_34 : i32 to vector<1x8x1xi32>
      %c2147483647_i32_35 = arith.constant 2147483647 : i32
      %76 = vector.broadcast %c2147483647_i32_35 : i32 to vector<1x8x1xi32>
      %c0_i32_36 = arith.constant 0 : i32
      %c32_i32_37 = arith.constant 32 : i32
      %77 = arith.addi %c0_i32_36, %c32_i32_37 : i32
      %c1_i32_38 = arith.constant 1 : i32
      %78:2 = scf.for %arg9 = %c0_i32_36 to %77 step %c1_i32_38 iter_args(%arg10 = %75, %arg11 = %76) -> (vector<1x8x1xi32>, vector<1x8x1xi32>)  : i32 {
        %118 = arith.ori %arg10, %arg11 : vector<1x8x1xi32>
        %119 = arith.xori %arg10, %arg11 : vector<1x8x1xi32>
        %c1_i32_54 = arith.constant 1 : i32
        %120 = vector.broadcast %c1_i32_54 : i32 to vector<1x8x1xi32>
        %121 = arith.shrsi %119, %120 : vector<1x8x1xi32>
        %122 = arith.subi %118, %121 : vector<1x8x1xi32>
        %123 = vector.broadcast %122 : vector<1x8x1xi32> to vector<1x8x256xi32>
        %124 = arith.cmpi sge, %40, %123 : vector<1x8x256xi32>
        %125 = arith.extui %124 : vector<1x8x256xi1> to vector<1x8x256xi32>
        %126 = arith.sitofp %125 : vector<1x8x256xi32> to vector<1x8x256xf32>
        %cst_55 = arith.constant dense<0.000000e+00> : vector<1x8xf32>
        %127 = vector.multi_reduction <add>, %126, %cst_55 [2] : vector<1x8x256xf32> to vector<1x8xf32>
        %128 = vector.shape_cast %127 : vector<1x8xf32> to vector<1x8x1xf32>
        %cst_56 = arith.constant dense<0.000000e+00> : vector<8x1xf32>
        %129 = vector.multi_reduction <add>, %128, %cst_56 [0] : vector<1x8x1xf32> to vector<8x1xf32>
        %130 = vector.shape_cast %129 : vector<8x1xf32> to vector<1x8x1xf32>
        %cst_57 = arith.constant 8.000000e+00 : f32
        %131 = vector.broadcast %cst_57 : f32 to vector<1x8x1xf32>
        %132 = arith.cmpf oge, %130, %131 : vector<1x8x1xf32>
        %133 = arith.select %132, %122, %arg10 : vector<1x8x1xi1>, vector<1x8x1xi32>
        %c1_i32_58 = arith.constant 1 : i32
        %134 = vector.broadcast %c1_i32_58 : i32 to vector<1x8x1xi32>
        %135 = arith.subi %122, %134 : vector<1x8x1xi32>
        %136 = arith.select %132, %arg11, %135 : vector<1x8x1xi1>, vector<1x8x1xi32>
        scf.yield %133, %136 : vector<1x8x1xi32>, vector<1x8x1xi32>
      }
      %79 = vector.broadcast %78#0 : vector<1x8x1xi32> to vector<1x8x256xi32>
      %80 = arith.cmpi sgt, %40, %79 : vector<1x8x256xi32>
      %cst_39 = arith.constant 0.000000e+00 : f32
      %81 = vector.broadcast %cst_39 : f32 to vector<1x8x256xf32>
      %82 = arith.select %80, %43, %81 : vector<1x8x256xi1>, vector<1x8x256xf32>
      %cst_40 = arith.constant dense<0.000000e+00> : vector<1x8xf32>
      %83 = vector.multi_reduction <add>, %82, %cst_40 [2] : vector<1x8x256xf32> to vector<1x8xf32>
      %84 = vector.shape_cast %83 : vector<1x8xf32> to vector<1x8x1xf32>
      %cst_41 = arith.constant dense<0.000000e+00> : vector<8x1xf32>
      %85 = vector.multi_reduction <add>, %84, %cst_41 [0] : vector<1x8x1xf32> to vector<8x1xf32>
      %86 = vector.shape_cast %85 : vector<8x1xf32> to vector<1x8x1xf32>
      %87 = arith.extui %80 : vector<1x8x256xi1> to vector<1x8x256xi32>
      %88 = arith.sitofp %87 : vector<1x8x256xi32> to vector<1x8x256xf32>
      %cst_42 = arith.constant dense<0.000000e+00> : vector<1x8xf32>
      %89 = vector.multi_reduction <add>, %88, %cst_42 [2] : vector<1x8x256xf32> to vector<1x8xf32>
      %90 = vector.shape_cast %89 : vector<1x8xf32> to vector<1x8x1xf32>
      %cst_43 = arith.constant dense<0.000000e+00> : vector<8x1xf32>
      %91 = vector.multi_reduction <add>, %90, %cst_43 [0] : vector<1x8x1xf32> to vector<8x1xf32>
      %92 = vector.shape_cast %91 : vector<8x1xf32> to vector<1x8x1xf32>
      %c31_i32_44 = arith.constant 31 : i32
      %93 = vector.broadcast %c31_i32_44 : i32 to vector<1x8x1xi32>
      %94 = arith.shrsi %78#0, %93 : vector<1x8x1xi32>
      %c2147483647_i32_45 = arith.constant 2147483647 : i32
      %95 = vector.broadcast %c2147483647_i32_45 : i32 to vector<1x8x1xi32>
      %96 = arith.andi %94, %95 : vector<1x8x1xi32>
      %97 = arith.xori %78#0, %96 : vector<1x8x1xi32>
      %98 = tpu.bitcast %97 : vector<1x8x1xi32> -> vector<1x8x1xf32>
      %cst_46 = arith.constant 1.000000e+01 : f32
      %99 = vector.broadcast %cst_46 : f32 to vector<1x8x1xf32>
      %100 = arith.mulf %98, %99 : vector<1x8x1xf32>
      %101 = math.exp %100 : vector<1x8x1xf32>
      %cst_47 = arith.constant 8.000000e+00 : f32
      %102 = vector.broadcast %cst_47 : f32 to vector<1x8x1xf32>
      %103 = arith.subf %102, %92 : vector<1x8x1xf32>
      %104 = arith.mulf %103, %101 : vector<1x8x1xf32>
      %105 = arith.addf %86, %104 : vector<1x8x1xf32>
      %c0_48 = arith.constant 0 : index
      %c0_49 = arith.constant 0 : index
      %106 = vector.load %arg8[%c0_48, %c0_49] : memref<8x1xf32, #tpu.memory_space<vmem>>, vector<8x1xf32>
      %cst_50 = arith.constant 1.000000e+01 : f32
      %107 = vector.broadcast %cst_50 : f32 to vector<8x1xf32>
      %108 = arith.mulf %106, %107 : vector<8x1xf32>
      %109 = math.exp %108 : vector<8x1xf32>
      %110 = vector.shape_cast %105 : vector<1x8x1xf32> to vector<8x1xf32>
      %111 = arith.addf %109, %110 : vector<8x1xf32>
      %112 = vector.shape_cast %74 : vector<1x8x1xf32> to vector<8x1xf32>
      %113 = arith.divf %111, %112 : vector<8x1xf32>
      %cst_51 = arith.constant 1.000000e-07 : f32
      %114 = vector.broadcast %cst_51 : f32 to vector<8x1xf32>
      %115 = arith.addf %113, %114 : vector<8x1xf32>
      %116 = math.log %115 : vector<8x1xf32>
      %c0_52 = arith.constant 0 : index
      %c0_53 = arith.constant 0 : index
      %117 = vector.load %arg6[%c0_52, %c0_53] : memref<8x1xf32, #tpu.memory_space<vmem>>, vector<8x1xf32>
      tpu.vector_store %arg6[%c0_52, %c0_53], %116 {strides = array<i32>} : memref<8x1xf32, #tpu.memory_space<vmem>>, vector<8x1xf32>,
    } else {
    }
    return
  }
  func.func @transform_0(%arg0: i32, %arg1: i32) -> (i32, i32) {
    %c0_i32 = arith.constant 0 : i32
    %c0_i32_0 = arith.constant 0 : i32
    return %arg0, %c0_i32 : i32, i32
  }
  func.func @transform_1(%arg0: i32, %arg1: i32) -> (i32, i32) {
    %c0_i32 = arith.constant 0 : i32
    %c0_i32_0 = arith.constant 0 : i32
    return %arg0, %c0_i32 : i32, i32
  }
  func.func @transform_2(%arg0: i32, %arg1: i32) -> (i32, i32) {
    %c0_i32 = arith.constant 0 : i32
    %c0_i32_0 = arith.constant 0 : i32
    return %arg1, %c0_i32 : i32, i32
  }
  func.func @transform_3(%arg0: i32, %arg1: i32) -> (i32, i32) {
    %c0_i32 = arith.constant 0 : i32
    return %arg0, %arg1 : i32, i32
  }
  func.func @transform_4(%arg0: i32, %arg1: i32) -> (i32, i32) {
    %c0_i32 = arith.constant 0 : i32
    %c0_i32_0 = arith.constant 0 : i32
    return %arg0, %c0_i32 : i32, i32
  }
}

</mosaic_0001>

<llo_original>
// kernel: tpu_custom_call.1
$region0: #{tpu_custom_call.1}
  #allocation0 [shape = 'u32[]', space=smem, size = 0x4, offset = 0x4, fixed_abs, tag = 'smem constant byte address 0x4 - core index']
  #allocation1 [shape = 'u32[144,128]{1,0:T(1,128)}', space=vmem, size = 0x12000, scoped, tag = 'internal scratch']
  #allocation2 [shape = 'f32[1,8,256]{2,1,0:T(8,128)}', space=vmem, size = 0x2000, scoped, tag = 'scratch operand']
  #allocation3 [shape = 'f32[8,1]{1,0:T(8,128)}', space=vmem, size = 0x1000, scoped, tag = 'scratch operand']
  %s0 = inlined_call_operand.vmem [shape: f32[8,128], index: 0, kind: input, shape index: {}]
  %s1 = inlined_call_operand.vmem [shape: s32[8,1], index: 1, kind: input, shape index: {}]
  %s2 = inlined_call_operand.hbm [shape: f32[256,128], index: 2, kind: input, shape index: {}]
  %s3 = inlined_call_operand.hbm [shape: f32[8,256], index: 3, kind: output, shape index: {0}]
  %s4 = inlined_call_operand.vmem [shape: f32[8,1], index: 4, kind: output, shape index: {1}]
  %5 = xla_tuple %s3, %s4
  %s6 = sld [smem:[#allocation0]]
  $region56: #{tpu_custom_call.1} parent=0
    _
  %s8 = ssub.s32 1, %s6
  %s9 = scalar_select 0, %s8, %s6
  $region1: #{tpu_custom_call.1} parent=0
    #allocation4 [shape = 'u8[131072]{0}', space=vmem, size = 0x20000, scoped, tag = 'input window, operand 2, single buffered']
    #allocation5 [shape = 's32[1]{0}', space=sflag, size = 0x4, scoped, tag = 'scoped memory for tpu_custom_call.1']
    #allocation6 [shape = 's32[1]{0}', space=sflag, size = 0x4, scoped, tag = 'scoped memory for tpu_custom_call.1']
    #allocation7 [shape = 'u8[8192]{0}', space=vmem, size = 0x2000, scoped, tag = 'output window, operand 0, single buffered']
    %10 = vsyncpa [#allocation5], 0
    %11 = vsyncpa [#allocation6], 0
    // Predicated region
    $region2: #{tpu_custom_call.1} parent=1 // pred_check
      _
    $region3: #{tpu_custom_call.1} parent=1 // pred_check_branch
      %13 = sbr.rel (0) target = $region5
    $region4: #{tpu_custom_call.1} parent=1 // pred_region
      _
    $region5: #{tpu_custom_call.1} parent=1 // pred_fallthru
      _
    // Predicated region
    $region6: #{tpu_custom_call.1} parent=1 // pred_check
      _
    $region7: #{tpu_custom_call.1} parent=1 // pred_check_branch
      %15 = sbr.rel (0) target = $region9
    $region8: #{tpu_custom_call.1} parent=1 // pred_region
      _
    $region9: #{tpu_custom_call.1} parent=1 // pred_fallthru
      _
    // Predicated region
    $region10: #{tpu_custom_call.1} parent=1 // pred_check
      _
    $region11: #{tpu_custom_call.1} parent=1 // pred_check_branch
      %17 = sbr.rel (0) target = $region13
    $region12: #{tpu_custom_call.1} parent=1 // pred_region
      %s19 = ssub.s32 4096, 4096
      %20 = vsyncadd [#allocation5], %s19
      %s21 = sshll.u32 [#allocation4], 4
      %s22 = int_to_ptr.vmem [resolvable:$true] %s21
      %27 = dma.hbm_to_vmem [thread:$0]  %s2, 4096, %s22, [#allocation5], 128, 128, 8
    $region13: #{tpu_custom_call.1} parent=1 // pred_fallthru
      _
    // Predicated region
    $region14: #{tpu_custom_call.1} parent=1 // pred_check
      _
    $region15: #{tpu_custom_call.1} parent=1 // pred_check_branch
      %29 = sbr.rel (0) target = $region17
    $region16: #{tpu_custom_call.1} parent=1 // pred_region
      %30 = dma.done [#allocation5], 4096
    $region17: #{tpu_custom_call.1} parent=1 // pred_fallthru
      _
    %v31 = vld [vmem:[%s0] sm:$0xff]
    %v32 = vmul.f32 %v31, %v31
    %33 = vadd.xlane.f32.xlu0 %v32
    %v34 = vpop.xlane.xlu0 %33
    %v35 = vrsqrt.pop %v34
    %v36 = vmul.f32 %v31, %v35
    %v37 = vld [vmem:[#allocation4] sm:$0xff]
    %v38 = vld [vmem:[#allocation4 + $0x8] sm:$0xff]
    %v39 = vld [vmem:[#allocation4 + $0x10] sm:$0xff]
    %v40 = vld [vmem:[#allocation4 + $0x18] sm:$0xff]
    %v41 = vld [vmem:[#allocation4 + $0x20] sm:$0xff]
    %v42 = vld [vmem:[#allocation4 + $0x28] sm:$0xff]
    %v43 = vld [vmem:[#allocation4 + $0x30] sm:$0xff]
    %v44 = vld [vmem:[#allocation4 + $0x38] sm:$0xff]
    %v45 = vld [vmem:[#allocation4 + $0x40] sm:$0xff]
    %v46 = vld [vmem:[#allocation4 + $0x48] sm:$0xff]
    %v47 = vld [vmem:[#allocation4 + $0x50] sm:$0xff]
    %v48 = vld [vmem:[#allocation4 + $0x58] sm:$0xff]
    %v49 = vld [vmem:[#allocation4 + $0x60] sm:$0xff]
    %v50 = vld [vmem:[#allocation4 + $0x68] sm:$0xff]
    %v51 = vld [vmem:[#allocation4 + $0x70] sm:$0xff]
    %v52 = vld [vmem:[#allocation4 + $0x78] sm:$0xff]
    %v53 = vld [vmem:[#allocation4 + $0x80] sm:$0xff]
    %v54 = vld [vmem:[#allocation4 + $0x88] sm:$0xff]
    %v55 = vld [vmem:[#allocation4 + $0x90] sm:$0xff]
    %v56 = vld [vmem:[#allocation4 + $0x98] sm:$0xff]
    %v57 = vld [vmem:[#allocation4 + $0xa0] sm:$0xff]
    %v58 = vld [vmem:[#allocation4 + $0xa8] sm:$0xff]
    %v59 = vld [vmem:[#allocation4 + $0xb0] sm:$0xff]
    %v60 = vld [vmem:[#allocation4 + $0xb8] sm:$0xff]
    %v61 = vld [vmem:[#allocation4 + $0xc0] sm:$0xff]
    %v62 = vld [vmem:[#allocation4 + $0xc8] sm:$0xff]
    %v63 = vld [vmem:[#allocation4 + $0xd0] sm:$0xff]
    %v64 = vld [vmem:[#allocation4 + $0xd8] sm:$0xff]
    %v65 = vld [vmem:[#allocation4 + $0xe0] sm:$0xff]
    %v66 = vld [vmem:[#allocation4 + $0xe8] sm:$0xff]
    %v67 = vld [vmem:[#allocation4 + $0xf0] sm:$0xff]
    %v68 = vld [vmem:[#allocation4 + $0xf8] sm:$0xff]
    %69 = vmatprep.subr.mxu0 0.0
    %70 = vmatpush1.xpose.msra.mxu0 %v52
    %71 = vmatprep.subr.mxu0 0.0
    %72 = vmatpush1.xpose.msra.mxu0 %v51
    %73 = vmatprep.subr.mxu0 0.0
    %74 = vmatpush1.xpose.msra.mxu0 %v50
    %75 = vmatprep.subr.mxu0 0.0
    %76 = vmatpush1.xpose.msra.mxu0 %v49
    %77 = vmatprep.subr.mxu0 0.0
    %78 = vmatpush1.xpose.msra.mxu0 %v48
    %79 = vmatprep.subr.mxu0 0.0
    %80 = vmatpush1.xpose.msra.mxu0 %v47
    %81 = vmatprep.subr.mxu0 0.0
    %82 = vmatpush1.xpose.msra.mxu0 %v46
    %83 = vmatprep.subr.mxu0 0.0
    %84 = vmatpush1.xpose.msra.mxu0 %v45
    %85 = vmatprep.subr.mxu0 0.0
    %86 = vmatpush1.xpose.msra.mxu0 %v44
    %87 = vmatprep.subr.mxu0 0.0
    %88 = vmatpush1.xpose.msra.mxu0 %v43
    %89 = vmatprep.subr.mxu0 0.0
    %90 = vmatpush1.xpose.msra.mxu0 %v42
    %91 = vmatprep.subr.mxu0 0.0
    %92 = vmatpush1.xpose.msra.mxu0 %v41
    %93 = vmatprep.subr.mxu0 0.0
    %94 = vmatpush1.xpose.msra.mxu0 %v40
    %95 = vmatprep.subr.mxu0 0.0
    %96 = vmatpush1.xpose.msra.mxu0 %v39
    %97 = vmatprep.subr.mxu0 0.0
    %98 = vmatpush1.xpose.msra.mxu0 %v38
    %99 = vmatprep.subr.mxu0 0.0
    %100 = vmatpush1.xpose.msra.mxu0 %v37
    %101 = vmatprep.subr.mxu0 0.0
    %102 = vmatpush2.xpose.msra.mxu0 %v68
    %103 = vmatprep.subr.mxu0 0.0
    %104 = vmatpush2.xpose.msra.mxu0 %v67
    %105 = vmatprep.subr.mxu0 0.0
    %106 = vmatpush2.xpose.msra.mxu0 %v66
    %107 = vmatprep.subr.mxu0 0.0
    %108 = vmatpush2.xpose.msra.mxu0 %v65
    %109 = vmatprep.subr.mxu0 0.0
    %110 = vmatpush2.xpose.msra.mxu0 %v64
    %111 = vmatprep.subr.mxu0 0.0
    %112 = vmatpush2.xpose.msra.mxu0 %v63
    %113 = vmatprep.subr.mxu0 0.0
    %114 = vmatpush2.xpose.msra.mxu0 %v62
    %115 = vmatprep.subr.mxu0 0.0
    %116 = vmatpush2.xpose.msra.mxu0 %v61
    %117 = vmatprep.subr.mxu0 0.0
    %118 = vmatpush2.xpose.msra.mxu0 %v60
    %119 = vmatprep.subr.mxu0 0.0
    %120 = vmatpush2.xpose.msra.mxu0 %v59
    %121 = vmatprep.subr.mxu0 0.0
    %122 = vmatpush2.xpose.msra.mxu0 %v58
    %123 = vmatprep.subr.mxu0 0.0
    %124 = vmatpush2.xpose.msra.mxu0 %v57
    %125 = vmatprep.subr.mxu0 0.0
    %126 = vmatpush2.xpose.msra.mxu0 %v56
    %127 = vmatprep.subr.mxu0 0.0
    %128 = vmatpush2.xpose.msra.mxu0 %v55
    %129 = vmatprep.subr.mxu0 0.0
    %130 = vmatpush2.xpose.msra.mxu0 %v54
    %131 = vmatprep.subr.mxu0 0.0
    %132 = vmatpush2.xpose.msra.mxu0 %v53
    %133 = vmatprep.mubr.f32.mxu0 0.0
    %134 = vmatmul.mubr.f32.gmra.mxu0 %v36
    %v135 = vpop.f32.mrf.mxu0
    %v136 = vadd.f32 0.0, %v135
    %v137 = vpop.f32.mrf.mxu0
    %v138 = vadd.f32 0.0, %v137
    %139 = vdwg.mxu0
    %140 = vst [vmem:[#allocation7] sm:$0xff] %v136
    %141 = vst [vmem:[#allocation7 + $0x8] sm:$0xff] %v138
    %s142 = smul.u32 0, 256
    %v143 = vlaneseq
    %v144 = vand.u32 %v143, 127
    %v145 = vadd.s32 %v144, 128
    %v146 = vstv %s142
    %v147 = vadd.s32 %v146, %v144
    %v148 = vadd.s32 %v146, %v145
    %s149 = smul.u32 0, 2
    %s150 = smul.addr %s149, 8
    %s151 = scalar_lea.vmem [#allocation2], %s150
    %152 = vst [vmem:[%s151] sm:$0xff] %v136
    %153 = vst [vmem:[%s151 + $0x8] sm:$0xff] %v138
    %p154 = scmp.eq.s32.totalorder 0, 0
    // Predicated region
    $region18: #{tpu_custom_call.1} parent=1 // pred_check
      %p155 = pneg %p154
    $region19: #{tpu_custom_call.1} parent=1 // pred_check_branch
      %157 = sbr.rel (%p155) target = $region21
    $region20: #{tpu_custom_call.1} parent=1 // pred_region
      %vm158 = vcmask 7168
      %159 = vst.msk [vmem:[#allocation3] sm:$0xff] %vm158, 0.0
    $region21: #{tpu_custom_call.1} parent=1 // pred_fallthru
      _
    %v160 = vld [vmem:[#allocation3] sm:$0xff]
    %v161 = vld [vmem:[%s1] sm:$0xff]
    %162 = vset.pattern.permute.xlu0 0
    %163 = vperm.xlu0 %162, %v161
    %v164 = vpop.permute.xlu0 %163
    %vm165 = vcmp.eq.s32.totalorder %v147, %v164
    %vm166 = vcmp.eq.s32.totalorder %v148, %v164
    %v167 = vsel %vm165, %v136, 0.0
    %v168 = vsel %vm166, %v138, 0.0
    %v169 = vadd.f32 %v167, %v168
    %170 = vadd.xlane.f32.xlu0 %v169
    %v171 = vpop.xlane.xlu0 %170
    %v172 = vadd.f32 %v160, %v171
    %vm173 = vcmask 7168
    %174 = vst.msk [vmem:[#allocation3] sm:$0xff] %vm173, %v172
    // Predicated region
    $region22: #{tpu_custom_call.1} parent=1 // pred_check
      %p175 = pneg %p154
    $region23: #{tpu_custom_call.1} parent=1 // pred_check_branch
      %177 = sbr.rel (%p175) target = $region25
    $region24: #{tpu_custom_call.1} parent=1 // pred_region
      %v178 = vld [vmem:[#allocation2] sm:$0xff]
      %v179 = vld [vmem:[#allocation2 + $0x8] sm:$0xff]
      %v182 = vshra.s32 %v178, 31
      %v183 = vshra.s32 %v179, 31
      %v184 = vand.u32 %v182, 2147483647
      %v185 = vand.u32 %v183, 2147483647
      %v186 = vxor.u32 %v178, %v184
      %v187 = vxor.u32 %v179, %v185
      %v188 = vmul.f32 %v178, 10.0
      %v189 = vmul.f32 %v179, 10.0
      %v190 = vmul.f32 %v188, 1.442695
      %v191 = vpow.pop %v190
      %v192 = vmul.f32 %v189, 1.442695
      %v193 = vpow.pop %v192
      loop: start=0, step=1, limit=32
      $region26: #{tpu_custom_call.1} parent=24 // loop_pre_header
        _
      $region27: #{tpu_custom_call.1} parent=24 // loop_header
        %s195 = sphi 0, %s199
        %p196 = scmp.ge.s32.totalorder %s195, 32
        %v200 = vphi 2147483648, %v217
        %v201 = vphi 2147483647, %v219
      $region28: #{tpu_custom_call.1} parent=24 // loop_header_branch
        %198 = sbr.rel (%p196) target = $region32
      $region29: #{tpu_custom_call.1} parent=24 // loop_body
        %v202 = vor.u32 %v200, %v201
        %v203 = vxor.u32 %v200, %v201
        %v204 = vshra.s32 %v203, 1
        %v205 = vsub.s32 %v202, %v204
        %vm206 = vcmp.ge.s32.totalorder %v186, %v205
        %vm207 = vcmp.ge.s32.totalorder %v187, %v205
        %v208 = vsel %vm206, 1, 0
        %v209 = vsel %vm207, 1, 0
        %v210 = vcvt.s32.f32 %v208
        %v211 = vcvt.s32.f32 %v209
        %v212 = vadd.f32 %v210, %v211
        %213 = vadd.xlane.f32.xlu0 %v212
        %v214 = vpop.xlane.xlu0 %213
        %v215 = vadd.f32 %v214, 0.0
        %vm216 = vcmp.ge.f32.partialorder %v215, 64.0
        %v217 = vsel %vm216, %v205, %v200
        %v218 = vsub.s32 %v205, 1
        %v219 = vsel %vm216, %v201, %v218
      $region30: #{tpu_custom_call.1} parent=24 // loop_footer
        %s199 = sadd.s32 1, %s195
      $region31: #{tpu_custom_call.1} parent=24 // loop_footer_branch
        %194 = sbr.rel target = $region27
      $region32: #{tpu_custom_call.1} parent=24 // loop_exit
        _
      %vm220 = vcmp.gt.s32.totalorder %v186, %v200
      %vm221 = vcmp.gt.s32.totalorder %v187, %v200
      %v222 = vsel %vm220, %v191, 0.0
      %v223 = vsel %vm221, %v193, 0.0
      %v224 = vadd.f32 %v222, %v223
      %225 = vadd.xlane.f32.xlu0 %v224
      %v226 = vpop.xlane.xlu0 %225
      %v227 = vadd.f32 %v226, 0.0
      %v228 = vsel %vm220, 1, 0
      %v229 = vsel %vm221, 1, 0
      %v230 = vcvt.s32.f32 %v228
      %v231 = vcvt.s32.f32 %v229
      %v232 = vadd.f32 %v230, %v231
      %233 = vadd.xlane.f32.xlu0 %v232
      %v234 = vpop.xlane.xlu0 %233
      %v235 = vadd.f32 %v234, 0.0
      %v236 = vshra.s32 %v200, 31
      %v237 = vand.u32 %v236, 2147483647
      %v238 = vxor.u32 %v200, %v237
      %v240 = vmul.f32 %v238, 10.0
      %v241 = vmul.f32 %v240, 1.442695
      %v242 = vpow.pop %v241
      %v243 = vsub.f32 64.0, %v235
      %v244 = vmul.f32 %v243, %v242
      %v245 = vadd.f32 %v227, %v244
      loop: start=0, step=1, limit=32
      $region33: #{tpu_custom_call.1} parent=24 // loop_pre_header
        _
      $region34: #{tpu_custom_call.1} parent=24 // loop_header
        %s247 = sphi 0, %s251
        %p248 = scmp.ge.s32.totalorder %s247, 32
        %v252 = vphi 2147483648, %v269
        %v253 = vphi 2147483647, %v271
      $region35: #{tpu_custom_call.1} parent=24 // loop_header_branch
        %250 = sbr.rel (%p248) target = $region39
      $region36: #{tpu_custom_call.1} parent=24 // loop_body
        %v254 = vor.u32 %v252, %v253
        %v255 = vxor.u32 %v252, %v253
        %v256 = vshra.s32 %v255, 1
        %v257 = vsub.s32 %v254, %v256
        %vm258 = vcmp.ge.s32.totalorder %v186, %v257
        %vm259 = vcmp.ge.s32.totalorder %v187, %v257
        %v260 = vsel %vm258, 1, 0
        %v261 = vsel %vm259, 1, 0
        %v262 = vcvt.s32.f32 %v260
        %v263 = vcvt.s32.f32 %v261
        %v264 = vadd.f32 %v262, %v263
        %265 = vadd.xlane.f32.xlu0 %v264
        %v266 = vpop.xlane.xlu0 %265
        %v267 = vadd.f32 %v266, 0.0
        %vm268 = vcmp.ge.f32.partialorder %v267, 8.0
        %v269 = vsel %vm268, %v257, %v252
        %v270 = vsub.s32 %v257, 1
        %v271 = vsel %vm268, %v253, %v270
      $region37: #{tpu_custom_call.1} parent=24 // loop_footer
        %s251 = sadd.s32 1, %s247
      $region38: #{tpu_custom_call.1} parent=24 // loop_footer_branch
        %246 = sbr.rel target = $region34
      $region39: #{tpu_custom_call.1} parent=24 // loop_exit
        _
      %vm272 = vcmp.gt.s32.totalorder %v186, %v252
      %vm273 = vcmp.gt.s32.totalorder %v187, %v252
      %v274 = vsel %vm272, %v191, 0.0
      %v275 = vsel %vm273, %v193, 0.0
      %v276 = vadd.f32 %v274, %v275
      %277 = vadd.xlane.f32.xlu0 %v276
      %v278 = vpop.xlane.xlu0 %277
      %v279 = vadd.f32 %v278, 0.0
      %v280 = vsel %vm272, 1, 0
      %v281 = vsel %vm273, 1, 0
      %v282 = vcvt.s32.f32 %v280
      %v283 = vcvt.s32.f32 %v281
      %v284 = vadd.f32 %v282, %v283
      %285 = vadd.xlane.f32.xlu0 %v284
      %v286 = vpop.xlane.xlu0 %285
      %v287 = vadd.f32 %v286, 0.0
      %v288 = vshra.s32 %v252, 31
      %v289 = vand.u32 %v288, 2147483647
      %v290 = vxor.u32 %v252, %v289
      %v292 = vmul.f32 %v290, 10.0
      %v293 = vmul.f32 %v292, 1.442695
      %v294 = vpow.pop %v293
      %v295 = vsub.f32 8.0, %v287
      %v296 = vmul.f32 %v295, %v294
      %v297 = vadd.f32 %v279, %v296
      %v298 = vld [vmem:[#allocation3] sm:$0xff]
      %v299 = vmul.f32 %v298, 10.0
      %v300 = vmul.f32 %v299, 1.442695
      %v301 = vpow.pop %v300
      %v302 = vadd.f32 %v301, %v297
      %v303 = vrcp.pop %v245
      %v304 = vmul.f32 %v302, %v303
      %v305 = vadd.f32 %v304, 1e-07
      %v306 = vlog2.pop %v305
      %v307 = vmul.f32 %v306, 0.6931472
      %308 = vst.msk [vmem:[%s4] sm:$0xff] %vm173, %v307
    $region25: #{tpu_custom_call.1} parent=1 // pred_fallthru
      _
    // Predicated region
    $region40: #{tpu_custom_call.1} parent=1 // pred_check
      _
    $region41: #{tpu_custom_call.1} parent=1 // pred_check_branch
      %310 = sbr.rel (0) target = $region43
    $region42: #{tpu_custom_call.1} parent=1 // pred_region
      %s312 = ssub.s32 256, 256
      %313 = vsyncadd [#allocation6], %s312
      %s315 = sshll.u32 [#allocation7], 4
      %s316 = int_to_ptr.vmem [resolvable:$true] %s315
      %318 = dma.vmem_to_hbm [thread:$0]  %s316, 256, %s3, [#allocation6]
    $region43: #{tpu_custom_call.1} parent=1 // pred_fallthru
      _
    // Predicated region
    $region44: #{tpu_custom_call.1} parent=1 // pred_check
      _
    $region45: #{tpu_custom_call.1} parent=1 // pred_check_branch
      %320 = sbr.rel (0) target = $region47
    $region46: #{tpu_custom_call.1} parent=1 // pred_region
      _
    $region47: #{tpu_custom_call.1} parent=1 // pred_fallthru
      _
    // Predicated region
    $region48: #{tpu_custom_call.1} parent=1 // pred_check
      _
    $region49: #{tpu_custom_call.1} parent=1 // pred_check_branch
      %322 = sbr.rel (0) target = $region51
    $region50: #{tpu_custom_call.1} parent=1 // pred_region
      %323 = dma.done [#allocation6], 256
    $region51: #{tpu_custom_call.1} parent=1 // pred_fallthru
      _
    // Predicated region
    $region52: #{tpu_custom_call.1} parent=1 // pred_check
      _
    $region53: #{tpu_custom_call.1} parent=1 // pred_check_branch
      %325 = sbr.rel (0) target = $region55
    $region54: #{tpu_custom_call.1} parent=1 // pred_region
      _
    $region55: #{tpu_custom_call.1} parent=1 // pred_fallthru
      _
    %326 = vsyncpa [#allocation5], 1
    %327 = vsyncpa [#allocation6], 1

</llo_original>
